<compile_context>
chip_gen: v5e
topology: v5e:2x2
jax: 0.10.0
libtpu: 0.0.40
codegen_flags: <defaults>
</compile_context>

<pallas_src>
import functools

import jax
import jax.numpy as jnp
from jax.experimental import pallas as pl
from jax.experimental.pallas import tpu as pltpu

_MASK_VALUE = -1e30  # large finite negative: no inf-inf -> NaN hazard


def _layernorm(z, g, b, eps=1e-5):
    mu = jnp.mean(z, axis=-1, keepdims=True)
    var = jnp.mean((z - mu) ** 2, axis=-1, keepdims=True)
    return (z - mu) * jax.lax.rsqrt(var + eps) * g + b


def block_kernel(x_ref,
                 ln1_g_ref, ln1_b_ref,
                 wqkv_ref, wo_ref, bo_ref,
                 ln2_g_ref, ln2_b_ref,
                 w1_ref, b1_ref, w2_ref, b2_ref,
                 o_ref,
                 *, n_head: int, seq_len: int):
    f32, bf16 = jnp.float32, jnp.bfloat16

    x = x_ref[...].astype(f32)            # (R, C); R = (#sequences this step) * T
    R, C = x.shape
    T = seq_len
    nb = R // T                           # sequences handled in this grid step
    hs = C // n_head

    # ---------------- attention branch ----------------
    xn = _layernorm(x, ln1_g_ref[...], ln1_b_ref[...])            # f32 elementwise

    # Single wide K=C matmul for Q, K and V of all heads.  The attention
    # scale (C**-0.5, matching the reference which uses n_embd, not head_size)
    # is already folded into the Q columns of Wqkv host-side.
    qkv = jnp.dot(xn.astype(bf16), wqkv_ref[...],
                  preferred_element_type=f32)                     # (R, 3C)

    # Additive causal mask, built once per grid step (outside the head loop).
    row = jax.lax.broadcasted_iota(jnp.int32, (T, T), 0)
    col = jax.lax.broadcasted_iota(jnp.int32, (T, T), 1)
    mask_add = jnp.where(row >= col, 0.0, _MASK_VALUE).astype(f32)[None]  # (1,T,T)

    # Per-head attention: only one head's (nb, T, T) score tile live at a time.
    # TODO(synk): at large T, convert to a fori_loop over KV blocks with an
    # online softmax (flash style) and a VMEM accumulator scratch.
    head_outs = []
    for h in range(n_head):
        q_h = qkv[:, h * hs:(h + 1) * hs].astype(bf16).reshape(nb, T, hs)
        k_h = qkv[:, C + h * hs:C + (h + 1) * hs].astype(bf16).reshape(nb, T, hs)
        v_h = qkv[:, 2 * C + h * hs:2 * C + (h + 1) * hs].astype(bf16).reshape(nb, T, hs)

        s = jnp.einsum('bqd,bkd->bqk', q_h, k_h,
                       preferred_element_type=f32)                # (nb, T, T)
        s = s + mask_add
        s = s - jnp.max(s, axis=-1, keepdims=True)                # f32 softmax
        p = jnp.exp(s)
        p = p * pl.reciprocal(jnp.sum(p, axis=-1, keepdims=True), approx=True)

        o_h = jnp.einsum('bqk,bkd->bqd', p.astype(bf16), v_h,
                         preferred_element_type=f32)              # (nb, T, hs)
        head_outs.append(o_h.reshape(R, hs))

    # Heads concatenated back onto the lane axis -> single flat K=C projection.
    att = jnp.concatenate(head_outs, axis=-1)                     # (R, C), f32
    sa = jnp.dot(att.astype(bf16), wo_ref[...],
                 preferred_element_type=f32) + bo_ref[...]

    x1 = x + sa                                                   # residual 1

    # ---------------- MLP branch ----------------
    xn2 = _layernorm(x1, ln2_g_ref[...], ln2_b_ref[...])
    h1 = jnp.dot(xn2.astype(bf16), w1_ref[...],
                 preferred_element_type=f32) + b1_ref[...]
    h1 = jnp.maximum(h1, 0.0)                                     # ReLU
    ff = jnp.dot(h1.astype(bf16), w2_ref[...],
                 preferred_element_type=f32) + b2_ref[...]

    o_ref[...] = (x1 + ff).astype(o_ref.dtype)                    # residual 2


def transformer_block(x, params, n_head, *, seqs_per_step=None):
    (ln1_g, ln1_b, wq, wk, wv, wo, bo,
     ln2_g, ln2_b, w1, b1, w2, b2) = params
    B, T, C = x.shape
    H = w1.shape[1]
    # NOTE: reference scales by n_embd**-0.5 (n_classes), not head_size**-0.5.
    scale = C ** (-0.5)

    # Row tiling: target ~1024 rows per grid step (good MXU M-occupancy,
    # activation tile double-buffers against compute), but keep >= 2 grid
    # steps whenever B >= 2 so the "parallel" axis can split across v7x's
    # two TensorCores.  Sweep per generation / model size.
    if seqs_per_step is None:
        target = max(1, 1024 // T)
        seqs_per_step = max(1, min(target, max(1, B // 2)))
        while B % seqs_per_step:
            seqs_per_step -= 1
    assert B % seqs_per_step == 0
    rows = seqs_per_step * T

    bf16 = jnp.bfloat16
    # Host-side (free) weight prep:
    #  * attention scale folded into Wq before the bf16 cast,
    #  * Q/K/V fused column-wise into one (C, 3C) weight (head-contiguous hs
    #    column groups preserved) -> single wide matmul in-kernel,
    #  * weights stored bf16 in HBM (halves weight DMA bytes, bf16-native MXU).
    wqkv = jnp.concatenate([wq * scale, wk, wv], axis=1).astype(bf16)   # (C, 3C)
    wo_b = wo.astype(bf16)
    w1_b, w2_b = w1.astype(bf16), w2.astype(bf16)

    x2 = x.reshape(B * T, C)   # flatten batch*seq into the matmul M dimension

    def const(shape):
        # Constant-index weight/bias blocks: stay resident across grid steps.
        # TODO(synk): single-buffer these (pipeline_mode=pl.Buffered(1)) to
        # halve weight VMEM (decisive on v7x's 64 MiB) once verified on the
        # target jax/Mosaic version.
        return pl.BlockSpec(shape, lambda i: (0,) * len(shape))

    in_specs = [
        pl.BlockSpec((rows, C), lambda i: (i, 0)),   # x row-tile
        const((1, C)), const((1, C)),                # ln1 gamma, beta
        const((C, 3 * C)),                           # Wqkv (bf16, Q pre-scaled)
        const((C, C)),                               # Wo flat (bf16)
        const((1, C)),                               # bo
        const((1, C)), const((1, C)),                # ln2 gamma, beta
        const((C, H)), const((1, H)),                # W1 (bf16), b1
        const((H, C)), const((1, C)),                # W2 (bf16), b2
    ]

    kernel = functools.partial(block_kernel, n_head=n_head, seq_len=T)
    out2 = pl.pallas_call(
        kernel,
        out_shape=jax.ShapeDtypeStruct((B * T, C), x.dtype),
        grid_spec=pltpu.PrefetchScalarGridSpec(
            num_scalar_prefetch=0,
            grid=(B // seqs_per_step,),
            in_specs=in_specs,
            out_specs=pl.BlockSpec((rows, C), lambda i: (i, 0)),
        ),
        compiler_params=pltpu.CompilerParams(
            dimension_semantics=("parallel",),
            # Below physical VMEM on every generation (v7x: 64 MiB total);
            # well above the 16/32 MiB scoped defaults.  Re-derive per gen.
            vmem_limit_bytes=48 * 1024 * 1024,
        ),
    )(x2, ln1_g, ln1_b, wqkv, wo_b, bo, ln2_g, ln2_b, w1_b, b1, w2_b, b2)
    return out2.reshape(B, T, C)


def init_params(key, n_embd, n_head):
    """Deterministic synthetic init. All linear weights stored (in, out), f32."""
    C, H = n_embd, 4 * n_embd
    ks = jax.random.split(key, 8)
    s = lambda fan_in: 1.0 / jnp.sqrt(fan_in)
    wq = jax.random.uniform(ks[0], (C, C), jnp.float32, -s(C), s(C))
    wk = jax.random.uniform(ks[1], (C, C), jnp.float32, -s(C), s(C))
    wv = jax.random.uniform(ks[2], (C, C), jnp.float32, -s(C), s(C))
    wo = jax.random.uniform(ks[3], (C, C), jnp.float32, -s(C), s(C))
    bo = jax.random.uniform(ks[4], (1, C), jnp.float32, -s(C), s(C))
    w1 = jax.random.uniform(ks[5], (C, H), jnp.float32, -s(C), s(C))
    b1 = jax.random.uniform(ks[6], (1, H), jnp.float32, -s(C), s(C))
    w2 = jax.random.uniform(ks[7], (H, C), jnp.float32, -s(H), s(H))
    b2 = jnp.zeros((1, C), jnp.float32)
    ln1_g = jnp.ones((1, C), jnp.float32)
    ln1_b = jnp.zeros((1, C), jnp.float32)
    ln2_g = jnp.ones((1, C), jnp.float32)
    ln2_b = jnp.zeros((1, C), jnp.float32)
    return (ln1_g, ln1_b, wq, wk, wv, wo, bo, ln2_g, ln2_b, w1, b1, w2, b2)


def reference_block(x, params, n_head):
    """Pure-JAX f32 reference mirroring the PyTorch module."""
    ln1_g, ln1_b, wq, wk, wv, wo, bo, ln2_g, ln2_b, w1, b1, w2, b2 = params
    B, T, C = x.shape
    hs = C // n_head
    xn = _layernorm(x, ln1_g, ln1_b)
    q, k, v = xn @ wq, xn @ wk, xn @ wv
    mask = jnp.tril(jnp.ones((T, T), bool))
    outs = []
    for h in range(n_head):
        qh, kh, vh = (a[..., h * hs:(h + 1) * hs] for a in (q, k, v))
        wei = jnp.einsum("btd,bsd->bts", qh, kh) * C ** (-0.5)
        wei = jnp.where(mask, wei, -jnp.inf)
        wei = jax.nn.softmax(wei, axis=-1)
        outs.append(jnp.einsum("bts,bsd->btd", wei, vh))
    sa = jnp.concatenate(outs, axis=-1) @ wo + bo
    x1 = x + sa
    xn2 = _layernorm(x1, ln2_g, ln2_b)
    ff = jnp.maximum(xn2 @ w1 + b1, 0.0) @ w2 + b2
    return x1 + ff


if __name__ == "__main__":
    n_embd, n_head, block_size = 32, 4, 8
    B, T = 2, 8          # T == block_size (full context)

    key = jax.random.PRNGKey(0)
    kx, kp = jax.random.split(key)
    x = jax.random.normal(kx, (B, T, n_embd), jnp.float32)
    params = init_params(kp, n_embd, n_head)

    out = jax.block_until_ready(transformer_block(x, params, n_head))
    ref = reference_block(x, params, n_head)

    assert out.shape == (B, T, n_embd)
    # Kernel feeds bf16 operands to the MXU (f32 accumulation) and uses an
    # approximate reciprocal in the softmax, so compare against the pure-f32
    # reference with a correspondingly relaxed tolerance.
    assert jnp.allclose(out, ref, atol=5e-2, rtol=5e-2), \
        float(jnp.max(jnp.abs(out - ref)))

    print("KERNEL_OK")
</pallas_src>

<mosaic_0001>
module attributes {stable_mosaic.version = 11 : i64} {
  func.func @block_kernel(%arg0: i32, %arg1: memref<8x32xf32, #tpu.memory_space<vmem>>, %arg2: memref<1x32xf32, #tpu.memory_space<vmem>>, %arg3: memref<1x32xf32, #tpu.memory_space<vmem>>, %arg4: memref<32x96xbf16, #tpu.memory_space<vmem>>, %arg5: memref<32x32xbf16, #tpu.memory_space<vmem>>, %arg6: memref<1x32xf32, #tpu.memory_space<vmem>>, %arg7: memref<1x32xf32, #tpu.memory_space<vmem>>, %arg8: memref<1x32xf32, #tpu.memory_space<vmem>>, %arg9: memref<32x128xbf16, #tpu.memory_space<vmem>>, %arg10: memref<1x128xf32, #tpu.memory_space<vmem>>, %arg11: memref<128x32xbf16, #tpu.memory_space<vmem>>, %arg12: memref<1x32xf32, #tpu.memory_space<vmem>>, %arg13: memref<8x32xf32, #tpu.memory_space<vmem>>) attributes {dimension_semantics = [#tpu.dimension_semantics<parallel>], iteration_bounds = array<i64: 2>, scalar_prefetch = 0 : i64, scratch_operands = 0 : i64, tpu.core_type = #tpu.core_type<tc>, window_params = [{transform_indices = @transform_0, window_bounds = array<i64: 8, 32>}, {pipeline_mode = #tpu.pipeline_mode<synchronous>, transform_indices = @transform_1, window_bounds = array<i64: 1, 32>}, {pipeline_mode = #tpu.pipeline_mode<synchronous>, transform_indices = @transform_2, window_bounds = array<i64: 1, 32>}, {pipeline_mode = #tpu.pipeline_mode<synchronous>, transform_indices = @transform_3, window_bounds = array<i64: 32, 96>}, {pipeline_mode = #tpu.pipeline_mode<synchronous>, transform_indices = @transform_4, window_bounds = array<i64: 32, 32>}, {pipeline_mode = #tpu.pipeline_mode<synchronous>, transform_indices = @transform_5, window_bounds = array<i64: 1, 32>}, {pipeline_mode = #tpu.pipeline_mode<synchronous>, transform_indices = @transform_6, window_bounds = array<i64: 1, 32>}, {pipeline_mode = #tpu.pipeline_mode<synchronous>, transform_indices = @transform_7, window_bounds = array<i64: 1, 32>}, {pipeline_mode = #tpu.pipeline_mode<synchronous>, transform_indices = @transform_8, window_bounds = array<i64: 32, 128>}, {pipeline_mode = #tpu.pipeline_mode<synchronous>, transform_indices = @transform_9, window_bounds = array<i64: 1, 128>}, {pipeline_mode = #tpu.pipeline_mode<synchronous>, transform_indices = @transform_10, window_bounds = array<i64: 128, 32>}, {pipeline_mode = #tpu.pipeline_mode<synchronous>, transform_indices = @transform_11, window_bounds = array<i64: 1, 32>}, {transform_indices = @transform_12, window_bounds = array<i64: 8, 32>}]} {
    %c0 = arith.constant 0 : index
    %c0_0 = arith.constant 0 : index
    %0 = vector.load %arg1[%c0, %c0_0] : memref<8x32xf32, #tpu.memory_space<vmem>>, vector<8x32xf32>
    %c0_1 = arith.constant 0 : index
    %c0_2 = arith.constant 0 : index
    %1 = vector.load %arg2[%c0_1, %c0_2] : memref<1x32xf32, #tpu.memory_space<vmem>>, vector<1x32xf32>
    %c0_3 = arith.constant 0 : index
    %c0_4 = arith.constant 0 : index
    %2 = vector.load %arg3[%c0_3, %c0_4] : memref<1x32xf32, #tpu.memory_space<vmem>>, vector<1x32xf32>
    %cst = arith.constant dense<0.000000e+00> : vector<8xf32>
    %3 = vector.multi_reduction <add>, %0, %cst [1] : vector<8x32xf32> to vector<8xf32>
    %4 = vector.shape_cast %3 : vector<8xf32> to vector<8x1xf32>
    %cst_5 = arith.constant 3.200000e+01 : f32
    %5 = vector.broadcast %cst_5 : f32 to vector<8x1xf32>
    %6 = arith.divf %4, %5 : vector<8x1xf32>
    %7 = vector.broadcast %6 : vector<8x1xf32> to vector<8x32xf32>
    %8 = arith.subf %0, %7 : vector<8x32xf32>
    %9 = arith.mulf %8, %8 : vector<8x32xf32>
    %cst_6 = arith.constant dense<0.000000e+00> : vector<8xf32>
    %10 = vector.multi_reduction <add>, %9, %cst_6 [1] : vector<8x32xf32> to vector<8xf32>
    %11 = vector.shape_cast %10 : vector<8xf32> to vector<8x1xf32>
    %cst_7 = arith.constant 3.200000e+01 : f32
    %12 = vector.broadcast %cst_7 : f32 to vector<8x1xf32>
    %13 = arith.divf %11, %12 : vector<8x1xf32>
    %14 = vector.broadcast %6 : vector<8x1xf32> to vector<8x32xf32>
    %15 = arith.subf %0, %14 : vector<8x32xf32>
    %cst_8 = arith.constant 9.99999974E-6 : f32
    %16 = vector.broadcast %cst_8 : f32 to vector<8x1xf32>
    %17 = arith.addf %13, %16 : vector<8x1xf32>
    %18 = math.rsqrt %17 : vector<8x1xf32>
    %19 = vector.broadcast %18 : vector<8x1xf32> to vector<8x32xf32>
    %20 = arith.mulf %15, %19 : vector<8x32xf32>
    %21 = vector.broadcast %1 : vector<1x32xf32> to vector<8x32xf32>
    %22 = arith.mulf %20, %21 : vector<8x32xf32>
    %23 = vector.broadcast %2 : vector<1x32xf32> to vector<8x32xf32>
    %24 = arith.addf %22, %23 : vector<8x32xf32>
    %25 = arith.truncf %24 : vector<8x32xf32> to vector<8x32xbf16>
    %c0_9 = arith.constant 0 : index
    %c0_10 = arith.constant 0 : index
    %26 = vector.load %arg4[%c0_9, %c0_10] : memref<32x96xbf16, #tpu.memory_space<vmem>>, vector<32x96xbf16>
    %cst_11 = arith.constant dense<0.000000e+00> : vector<8x96xf32>
    %27 = tpu.matmul %25, %26, %cst_11 {dimension_numbers = #tpu.dot_dimension_numbers<[1], [0], [0], [1], [0, 0, 1, 1], [], []>} : vector<8x32xbf16>, vector<32x96xbf16>, vector<8x96xf32> -> vector<8x96xf32>
    %28 = tpu.iota {dimensions = array<i32: 0>} : vector<8x8xi32>
    %29 = tpu.iota {dimensions = array<i32: 1>} : vector<8x8xi32>
    %30 = arith.cmpi sge, %28, %29 : vector<8x8xi32>
    %cst_12 = arith.constant 0.000000e+00 : f32
    %cst_13 = arith.constant -1.000000e+30 : f32
    %31 = vector.broadcast %cst_12 : f32 to vector<8x8xf32>
    %32 = vector.broadcast %cst_13 : f32 to vector<8x8xf32>
    %33 = arith.select %30, %31, %32 : vector<8x8xi1>, vector<8x8xf32>
    %34 = vector.shape_cast %33 : vector<8x8xf32> to vector<1x8x8xf32>
    %35 = vector.extract_strided_slice %27 {offsets = [0, 0], sizes = [8, 8], strides = [1, 1]} : vector<8x96xf32> to vector<8x8xf32>
    %36 = arith.truncf %35 : vector<8x8xf32> to vector<8x8xbf16>
    %37 = vector.shape_cast %36 : vector<8x8xbf16> to vector<1x8x8xbf16>
    %38 = vector.extract_strided_slice %27 {offsets = [0, 32], sizes = [8, 8], strides = [1, 1]} : vector<8x96xf32> to vector<8x8xf32>
    %39 = arith.truncf %38 : vector<8x8xf32> to vector<8x8xbf16>
    %40 = vector.shape_cast %39 : vector<8x8xbf16> to vector<1x8x8xbf16>
    %41 = vector.extract_strided_slice %27 {offsets = [0, 64], sizes = [8, 8], strides = [1, 1]} : vector<8x96xf32> to vector<8x8xf32>
    %42 = arith.truncf %41 : vector<8x8xf32> to vector<8x8xbf16>
    %43 = vector.shape_cast %42 : vector<8x8xbf16> to vector<1x8x8xbf16>
    "tpu.trace_start"() <{level = 10 : i32, message = "bqd,bkd->bqk"}> : () -> ()
    %cst_14 = arith.constant dense<0.000000e+00> : vector<1x8x8xf32>
    %44 = tpu.matmul %37, %40, %cst_14 {dimension_numbers = #tpu.dot_dimension_numbers<[2], [2], [1], [1], [0, 0, 0, 1, 1, 1], [0], [0]>} : vector<1x8x8xbf16>, vector<1x8x8xbf16>, vector<1x8x8xf32> -> vector<1x8x8xf32>
    "tpu.trace_stop"() : () -> ()
    %45 = arith.addf %44, %34 : vector<1x8x8xf32>
    %cst_15 = arith.constant dense<0xFF800000> : vector<1x8xf32>
    %46 = vector.multi_reduction <maximumf>, %45, %cst_15 [2] : vector<1x8x8xf32> to vector<1x8xf32>
    %47 = vector.shape_cast %46 : vector<1x8xf32> to vector<1x8x1xf32>
    %48 = vector.broadcast %47 : vector<1x8x1xf32> to vector<1x8x8xf32>
    %49 = arith.subf %45, %48 : vector<1x8x8xf32>
    %50 = math.exp %49 : vector<1x8x8xf32>
    %cst_16 = arith.constant dense<0.000000e+00> : vector<1x8xf32>
    %51 = vector.multi_reduction <add>, %50, %cst_16 [2] : vector<1x8x8xf32> to vector<1x8xf32>
    %52 = vector.shape_cast %51 : vector<1x8xf32> to vector<1x8x1xf32>
    %53 = tpu.reciprocal %52 {approx = true} : vector<1x8x1xf32> -> vector<1x8x1xf32>
    %54 = vector.broadcast %53 : vector<1x8x1xf32> to vector<1x8x8xf32>
    %55 = arith.mulf %50, %54 : vector<1x8x8xf32>
    %56 = arith.truncf %55 : vector<1x8x8xf32> to vector<1x8x8xbf16>
    "tpu.trace_start"() <{level = 10 : i32, message = "bqk,bkd->bqd"}> : () -> ()
    %cst_17 = arith.constant dense<0.000000e+00> : vector<1x8x8xf32>
    %57 = tpu.matmul %56, %43, %cst_17 {dimension_numbers = #tpu.dot_dimension_numbers<[2], [1], [1], [2], [0, 0, 0, 1, 1, 2], [0], [0]>} : vector<1x8x8xbf16>, vector<1x8x8xbf16>, vector<1x8x8xf32> -> vector<1x8x8xf32>
    "tpu.trace_stop"() : () -> ()
    %58 = vector.shape_cast %57 : vector<1x8x8xf32> to vector<8x8xf32>
    %59 = vector.extract_strided_slice %27 {offsets = [0, 8], sizes = [8, 8], strides = [1, 1]} : vector<8x96xf32> to vector<8x8xf32>
    %60 = arith.truncf %59 : vector<8x8xf32> to vector<8x8xbf16>
    %61 = vector.shape_cast %60 : vector<8x8xbf16> to vector<1x8x8xbf16>
    %62 = vector.extract_strided_slice %27 {offsets = [0, 40], sizes = [8, 8], strides = [1, 1]} : vector<8x96xf32> to vector<8x8xf32>
    %63 = arith.truncf %62 : vector<8x8xf32> to vector<8x8xbf16>
    %64 = vector.shape_cast %63 : vector<8x8xbf16> to vector<1x8x8xbf16>
    %65 = vector.extract_strided_slice %27 {offsets = [0, 72], sizes = [8, 8], strides = [1, 1]} : vector<8x96xf32> to vector<8x8xf32>
    %66 = arith.truncf %65 : vector<8x8xf32> to vector<8x8xbf16>
    %67 = vector.shape_cast %66 : vector<8x8xbf16> to vector<1x8x8xbf16>
    "tpu.trace_start"() <{level = 10 : i32, message = "bqd,bkd->bqk"}> : () -> ()
    %cst_18 = arith.constant dense<0.000000e+00> : vector<1x8x8xf32>
    %68 = tpu.matmul %61, %64, %cst_18 {dimension_numbers = #tpu.dot_dimension_numbers<[2], [2], [1], [1], [0, 0, 0, 1, 1, 1], [0], [0]>} : vector<1x8x8xbf16>, vector<1x8x8xbf16>, vector<1x8x8xf32> -> vector<1x8x8xf32>
    "tpu.trace_stop"() : () -> ()
    %69 = arith.addf %68, %34 : vector<1x8x8xf32>
    %cst_19 = arith.constant dense<0xFF800000> : vector<1x8xf32>
    %70 = vector.multi_reduction <maximumf>, %69, %cst_19 [2] : vector<1x8x8xf32> to vector<1x8xf32>
    %71 = vector.shape_cast %70 : vector<1x8xf32> to vector<1x8x1xf32>
    %72 = vector.broadcast %71 : vector<1x8x1xf32> to vector<1x8x8xf32>
    %73 = arith.subf %69, %72 : vector<1x8x8xf32>
    %74 = math.exp %73 : vector<1x8x8xf32>
    %cst_20 = arith.constant dense<0.000000e+00> : vector<1x8xf32>
    %75 = vector.multi_reduction <add>, %74, %cst_20 [2] : vector<1x8x8xf32> to vector<1x8xf32>
    %76 = vector.shape_cast %75 : vector<1x8xf32> to vector<1x8x1xf32>
    %77 = tpu.reciprocal %76 {approx = true} : vector<1x8x1xf32> -> vector<1x8x1xf32>
    %78 = vector.broadcast %77 : vector<1x8x1xf32> to vector<1x8x8xf32>
    %79 = arith.mulf %74, %78 : vector<1x8x8xf32>
    %80 = arith.truncf %79 : vector<1x8x8xf32> to vector<1x8x8xbf16>
    "tpu.trace_start"() <{level = 10 : i32, message = "bqk,bkd->bqd"}> : () -> ()
    %cst_21 = arith.constant dense<0.000000e+00> : vector<1x8x8xf32>
    %81 = tpu.matmul %80, %67, %cst_21 {dimension_numbers = #tpu.dot_dimension_numbers<[2], [1], [1], [2], [0, 0, 0, 1, 1, 2], [0], [0]>} : vector<1x8x8xbf16>, vector<1x8x8xbf16>, vector<1x8x8xf32> -> vector<1x8x8xf32>
    "tpu.trace_stop"() : () -> ()
    %82 = vector.shape_cast %81 : vector<1x8x8xf32> to vector<8x8xf32>
    %83 = vector.extract_strided_slice %27 {offsets = [0, 16], sizes = [8, 8], strides = [1, 1]} : vector<8x96xf32> to vector<8x8xf32>
    %84 = arith.truncf %83 : vector<8x8xf32> to vector<8x8xbf16>
    %85 = vector.shape_cast %84 : vector<8x8xbf16> to vector<1x8x8xbf16>
    %86 = vector.extract_strided_slice %27 {offsets = [0, 48], sizes = [8, 8], strides = [1, 1]} : vector<8x96xf32> to vector<8x8xf32>
    %87 = arith.truncf %86 : vector<8x8xf32> to vector<8x8xbf16>
    %88 = vector.shape_cast %87 : vector<8x8xbf16> to vector<1x8x8xbf16>
    %89 = vector.extract_strided_slice %27 {offsets = [0, 80], sizes = [8, 8], strides = [1, 1]} : vector<8x96xf32> to vector<8x8xf32>
    %90 = arith.truncf %89 : vector<8x8xf32> to vector<8x8xbf16>
    %91 = vector.shape_cast %90 : vector<8x8xbf16> to vector<1x8x8xbf16>
    "tpu.trace_start"() <{level = 10 : i32, message = "bqd,bkd->bqk"}> : () -> ()
    %cst_22 = arith.constant dense<0.000000e+00> : vector<1x8x8xf32>
    %92 = tpu.matmul %85, %88, %cst_22 {dimension_numbers = #tpu.dot_dimension_numbers<[2], [2], [1], [1], [0, 0, 0, 1, 1, 1], [0], [0]>} : vector<1x8x8xbf16>, vector<1x8x8xbf16>, vector<1x8x8xf32> -> vector<1x8x8xf32>
    "tpu.trace_stop"() : () -> ()
    %93 = arith.addf %92, %34 : vector<1x8x8xf32>
    %cst_23 = arith.constant dense<0xFF800000> : vector<1x8xf32>
    %94 = vector.multi_reduction <maximumf>, %93, %cst_23 [2] : vector<1x8x8xf32> to vector<1x8xf32>
    %95 = vector.shape_cast %94 : vector<1x8xf32> to vector<1x8x1xf32>
    %96 = vector.broadcast %95 : vector<1x8x1xf32> to vector<1x8x8xf32>
    %97 = arith.subf %93, %96 : vector<1x8x8xf32>
    %98 = math.exp %97 : vector<1x8x8xf32>
    %cst_24 = arith.constant dense<0.000000e+00> : vector<1x8xf32>
    %99 = vector.multi_reduction <add>, %98, %cst_24 [2] : vector<1x8x8xf32> to vector<1x8xf32>
    %100 = vector.shape_cast %99 : vector<1x8xf32> to vector<1x8x1xf32>
    %101 = tpu.reciprocal %100 {approx = true} : vector<1x8x1xf32> -> vector<1x8x1xf32>
    %102 = vector.broadcast %101 : vector<1x8x1xf32> to vector<1x8x8xf32>
    %103 = arith.mulf %98, %102 : vector<1x8x8xf32>
    %104 = arith.truncf %103 : vector<1x8x8xf32> to vector<1x8x8xbf16>
    "tpu.trace_start"() <{level = 10 : i32, message = "bqk,bkd->bqd"}> : () -> ()
    %cst_25 = arith.constant dense<0.000000e+00> : vector<1x8x8xf32>
    %105 = tpu.matmul %104, %91, %cst_25 {dimension_numbers = #tpu.dot_dimension_numbers<[2], [1], [1], [2], [0, 0, 0, 1, 1, 2], [0], [0]>} : vector<1x8x8xbf16>, vector<1x8x8xbf16>, vector<1x8x8xf32> -> vector<1x8x8xf32>
    "tpu.trace_stop"() : () -> ()
    %106 = vector.shape_cast %105 : vector<1x8x8xf32> to vector<8x8xf32>
    %107 = vector.extract_strided_slice %27 {offsets = [0, 24], sizes = [8, 8], strides = [1, 1]} : vector<8x96xf32> to vector<8x8xf32>
    %108 = arith.truncf %107 : vector<8x8xf32> to vector<8x8xbf16>
    %109 = vector.shape_cast %108 : vector<8x8xbf16> to vector<1x8x8xbf16>
    %110 = vector.extract_strided_slice %27 {offsets = [0, 56], sizes = [8, 8], strides = [1, 1]} : vector<8x96xf32> to vector<8x8xf32>
    %111 = arith.truncf %110 : vector<8x8xf32> to vector<8x8xbf16>
    %112 = vector.shape_cast %111 : vector<8x8xbf16> to vector<1x8x8xbf16>
    %113 = vector.extract_strided_slice %27 {offsets = [0, 88], sizes = [8, 8], strides = [1, 1]} : vector<8x96xf32> to vector<8x8xf32>
    %114 = arith.truncf %113 : vector<8x8xf32> to vector<8x8xbf16>
    %115 = vector.shape_cast %114 : vector<8x8xbf16> to vector<1x8x8xbf16>
    "tpu.trace_start"() <{level = 10 : i32, message = "bqd,bkd->bqk"}> : () -> ()
    %cst_26 = arith.constant dense<0.000000e+00> : vector<1x8x8xf32>
    %116 = tpu.matmul %109, %112, %cst_26 {dimension_numbers = #tpu.dot_dimension_numbers<[2], [2], [1], [1], [0, 0, 0, 1, 1, 1], [0], [0]>} : vector<1x8x8xbf16>, vector<1x8x8xbf16>, vector<1x8x8xf32> -> vector<1x8x8xf32>
    "tpu.trace_stop"() : () -> ()
    %117 = arith.addf %116, %34 : vector<1x8x8xf32>
    %cst_27 = arith.constant dense<0xFF800000> : vector<1x8xf32>
    %118 = vector.multi_reduction <maximumf>, %117, %cst_27 [2] : vector<1x8x8xf32> to vector<1x8xf32>
    %119 = vector.shape_cast %118 : vector<1x8xf32> to vector<1x8x1xf32>
    %120 = vector.broadcast %119 : vector<1x8x1xf32> to vector<1x8x8xf32>
    %121 = arith.subf %117, %120 : vector<1x8x8xf32>
    %122 = math.exp %121 : vector<1x8x8xf32>
    %cst_28 = arith.constant dense<0.000000e+00> : vector<1x8xf32>
    %123 = vector.multi_reduction <add>, %122, %cst_28 [2] : vector<1x8x8xf32> to vector<1x8xf32>
    %124 = vector.shape_cast %123 : vector<1x8xf32> to vector<1x8x1xf32>
    %125 = tpu.reciprocal %124 {approx = true} : vector<1x8x1xf32> -> vector<1x8x1xf32>
    %126 = vector.broadcast %125 : vector<1x8x1xf32> to vector<1x8x8xf32>
    %127 = arith.mulf %122, %126 : vector<1x8x8xf32>
    %128 = arith.truncf %127 : vector<1x8x8xf32> to vector<1x8x8xbf16>
    "tpu.trace_start"() <{level = 10 : i32, message = "bqk,bkd->bqd"}> : () -> ()
    %cst_29 = arith.constant dense<0.000000e+00> : vector<1x8x8xf32>
    %129 = tpu.matmul %128, %115, %cst_29 {dimension_numbers = #tpu.dot_dimension_numbers<[2], [1], [1], [2], [0, 0, 0, 1, 1, 2], [0], [0]>} : vector<1x8x8xbf16>, vector<1x8x8xbf16>, vector<1x8x8xf32> -> vector<1x8x8xf32>
    "tpu.trace_stop"() : () -> ()
    %130 = vector.shape_cast %129 : vector<1x8x8xf32> to vector<8x8xf32>
    %131 = tpu.concatenate %58, %82, %106, %130 in 1 : vector<8x8xf32>, vector<8x8xf32>, vector<8x8xf32>, vector<8x8xf32> -> vector<8x32xf32>
    %132 = arith.truncf %131 : vector<8x32xf32> to vector<8x32xbf16>
    %c0_30 = arith.constant 0 : index
    %c0_31 = arith.constant 0 : index
    %133 = vector.load %arg5[%c0_30, %c0_31] : memref<32x32xbf16, #tpu.memory_space<vmem>>, vector<32x32xbf16>
    %cst_32 = arith.constant dense<0.000000e+00> : vector<8x32xf32>
    %134 = tpu.matmul %132, %133, %cst_32 {dimension_numbers = #tpu.dot_dimension_numbers<[1], [0], [0], [1], [0, 0, 1, 1], [], []>} : vector<8x32xbf16>, vector<32x32xbf16>, vector<8x32xf32> -> vector<8x32xf32>
    %c0_33 = arith.constant 0 : index
    %c0_34 = arith.constant 0 : index
    %135 = vector.load %arg6[%c0_33, %c0_34] : memref<1x32xf32, #tpu.memory_space<vmem>>, vector<1x32xf32>
    %136 = vector.broadcast %135 : vector<1x32xf32> to vector<8x32xf32>
    %137 = arith.addf %134, %136 : vector<8x32xf32>
    %138 = arith.addf %0, %137 : vector<8x32xf32>
    %c0_35 = arith.constant 0 : index
    %c0_36 = arith.constant 0 : index
    %139 = vector.load %arg7[%c0_35, %c0_36] : memref<1x32xf32, #tpu.memory_space<vmem>>, vector<1x32xf32>
    %c0_37 = arith.constant 0 : index
    %c0_38 = arith.constant 0 : index
    %140 = vector.load %arg8[%c0_37, %c0_38] : memref<1x32xf32, #tpu.memory_space<vmem>>, vector<1x32xf32>
    %cst_39 = arith.constant dense<0.000000e+00> : vector<8xf32>
    %141 = vector.multi_reduction <add>, %138, %cst_39 [1] : vector<8x32xf32> to vector<8xf32>
    %142 = vector.shape_cast %141 : vector<8xf32> to vector<8x1xf32>
    %cst_40 = arith.constant 3.200000e+01 : f32
    %143 = vector.broadcast %cst_40 : f32 to vector<8x1xf32>
    %144 = arith.divf %142, %143 : vector<8x1xf32>
    %145 = vector.broadcast %144 : vector<8x1xf32> to vector<8x32xf32>
    %146 = arith.subf %138, %145 : vector<8x32xf32>
    %147 = arith.mulf %146, %146 : vector<8x32xf32>
    %cst_41 = arith.constant dense<0.000000e+00> : vector<8xf32>
    %148 = vector.multi_reduction <add>, %147, %cst_41 [1] : vector<8x32xf32> to vector<8xf32>
    %149 = vector.shape_cast %148 : vector<8xf32> to vector<8x1xf32>
    %cst_42 = arith.constant 3.200000e+01 : f32
    %150 = vector.broadcast %cst_42 : f32 to vector<8x1xf32>
    %151 = arith.divf %149, %150 : vector<8x1xf32>
    %152 = vector.broadcast %144 : vector<8x1xf32> to vector<8x32xf32>
    %153 = arith.subf %138, %152 : vector<8x32xf32>
    %cst_43 = arith.constant 9.99999974E-6 : f32
    %154 = vector.broadcast %cst_43 : f32 to vector<8x1xf32>
    %155 = arith.addf %151, %154 : vector<8x1xf32>
    %156 = math.rsqrt %155 : vector<8x1xf32>
    %157 = vector.broadcast %156 : vector<8x1xf32> to vector<8x32xf32>
    %158 = arith.mulf %153, %157 : vector<8x32xf32>
    %159 = vector.broadcast %139 : vector<1x32xf32> to vector<8x32xf32>
    %160 = arith.mulf %158, %159 : vector<8x32xf32>
    %161 = vector.broadcast %140 : vector<1x32xf32> to vector<8x32xf32>
    %162 = arith.addf %160, %161 : vector<8x32xf32>
    %163 = arith.truncf %162 : vector<8x32xf32> to vector<8x32xbf16>
    %c0_44 = arith.constant 0 : index
    %c0_45 = arith.constant 0 : index
    %164 = vector.load %arg9[%c0_44, %c0_45] : memref<32x128xbf16, #tpu.memory_space<vmem>>, vector<32x128xbf16>
    %cst_46 = arith.constant dense<0.000000e+00> : vector<8x128xf32>
    %165 = tpu.matmul %163, %164, %cst_46 {dimension_numbers = #tpu.dot_dimension_numbers<[1], [0], [0], [1], [0, 0, 1, 1], [], []>} : vector<8x32xbf16>, vector<32x128xbf16>, vector<8x128xf32> -> vector<8x128xf32>
    %c0_47 = arith.constant 0 : index
    %c0_48 = arith.constant 0 : index
    %166 = vector.load %arg10[%c0_47, %c0_48] : memref<1x128xf32, #tpu.memory_space<vmem>>, vector<1x128xf32>
    %167 = vector.broadcast %166 : vector<1x128xf32> to vector<8x128xf32>
    %168 = arith.addf %165, %167 : vector<8x128xf32>
    %cst_49 = arith.constant 0.000000e+00 : f32
    %169 = vector.broadcast %cst_49 : f32 to vector<8x128xf32>
    %170 = arith.maximumf %168, %169 : vector<8x128xf32>
    %171 = arith.truncf %170 : vector<8x128xf32> to vector<8x128xbf16>
    %c0_50 = arith.constant 0 : index
    %c0_51 = arith.constant 0 : index
    %172 = vector.load %arg11[%c0_50, %c0_51] : memref<128x32xbf16, #tpu.memory_space<vmem>>, vector<128x32xbf16>
    %cst_52 = arith.constant dense<0.000000e+00> : vector<8x32xf32>
    %173 = tpu.matmul %171, %172, %cst_52 {dimension_numbers = #tpu.dot_dimension_numbers<[1], [0], [0], [1], [0, 0, 1, 1], [], []>} : vector<8x128xbf16>, vector<128x32xbf16>, vector<8x32xf32> -> vector<8x32xf32>
    %c0_53 = arith.constant 0 : index
    %c0_54 = arith.constant 0 : index
    %174 = vector.load %arg12[%c0_53, %c0_54] : memref<1x32xf32, #tpu.memory_space<vmem>>, vector<1x32xf32>
    %175 = vector.broadcast %174 : vector<1x32xf32> to vector<8x32xf32>
    %176 = arith.addf %173, %175 : vector<8x32xf32>
    %177 = arith.addf %138, %176 : vector<8x32xf32>
    %c0_55 = arith.constant 0 : index
    %c0_56 = arith.constant 0 : index
    %178 = vector.load %arg13[%c0_55, %c0_56] : memref<8x32xf32, #tpu.memory_space<vmem>>, vector<8x32xf32>
    tpu.vector_store %arg13[%c0_55, %c0_56], %177 {strides = array<i32>} : memref<8x32xf32, #tpu.memory_space<vmem>>, vector<8x32xf32>,
    return
  }
  func.func @transform_0(%arg0: i32) -> (i32, i32) {
    %c0_i32 = arith.constant 0 : i32
    %c0_i32_0 = arith.constant 0 : i32
    return %arg0, %c0_i32 : i32, i32
  }
  func.func @transform_1(%arg0: i32) -> (i32, i32) {
    %c0_i32 = arith.constant 0 : i32
    %c0_i32_0 = arith.constant 0 : i32
    %c0_i32_1 = arith.constant 0 : i32
    return %c0_i32, %c0_i32_0 : i32, i32
  }
  func.func @transform_2(%arg0: i32) -> (i32, i32) {
    %c0_i32 = arith.constant 0 : i32
    %c0_i32_0 = arith.constant 0 : i32
    %c0_i32_1 = arith.constant 0 : i32
    return %c0_i32, %c0_i32_0 : i32, i32
  }
  func.func @transform_3(%arg0: i32) -> (i32, i32) {
    %c0_i32 = arith.constant 0 : i32
    %c0_i32_0 = arith.constant 0 : i32
    %c0_i32_1 = arith.constant 0 : i32
    return %c0_i32, %c0_i32_0 : i32, i32
  }
  func.func @transform_4(%arg0: i32) -> (i32, i32) {
    %c0_i32 = arith.constant 0 : i32
    %c0_i32_0 = arith.constant 0 : i32
    %c0_i32_1 = arith.constant 0 : i32
    return %c0_i32, %c0_i32_0 : i32, i32
  }
  func.func @transform_5(%arg0: i32) -> (i32, i32) {
    %c0_i32 = arith.constant 0 : i32
    %c0_i32_0 = arith.constant 0 : i32
    %c0_i32_1 = arith.constant 0 : i32
    return %c0_i32, %c0_i32_0 : i32, i32
  }
  func.func @transform_6(%arg0: i32) -> (i32, i32) {
    %c0_i32 = arith.constant 0 : i32
    %c0_i32_0 = arith.constant 0 : i32
    %c0_i32_1 = arith.constant 0 : i32
    return %c0_i32, %c0_i32_0 : i32, i32
  }
  func.func @transform_7(%arg0: i32) -> (i32, i32) {
    %c0_i32 = arith.constant 0 : i32
    %c0_i32_0 = arith.constant 0 : i32
    %c0_i32_1 = arith.constant 0 : i32
    return %c0_i32, %c0_i32_0 : i32, i32
  }
  func.func @transform_8(%arg0: i32) -> (i32, i32) {
    %c0_i32 = arith.constant 0 : i32
    %c0_i32_0 = arith.constant 0 : i32
    %c0_i32_1 = arith.constant 0 : i32
    return %c0_i32, %c0_i32_0 : i32, i32
  }
  func.func @transform_9(%arg0: i32) -> (i32, i32) {
    %c0_i32 = arith.constant 0 : i32
    %c0_i32_0 = arith.constant 0 : i32
    %c0_i32_1 = arith.constant 0 : i32
    return %c0_i32, %c0_i32_0 : i32, i32
  }
  func.func @transform_10(%arg0: i32) -> (i32, i32) {
    %c0_i32 = arith.constant 0 : i32
    %c0_i32_0 = arith.constant 0 : i32
    %c0_i32_1 = arith.constant 0 : i32
    return %c0_i32, %c0_i32_0 : i32, i32
  }
  func.func @transform_11(%arg0: i32) -> (i32, i32) {
    %c0_i32 = arith.constant 0 : i32
    %c0_i32_0 = arith.constant 0 : i32
    %c0_i32_1 = arith.constant 0 : i32
    return %c0_i32, %c0_i32_0 : i32, i32
  }
  func.func @transform_12(%arg0: i32) -> (i32, i32) {
    %c0_i32 = arith.constant 0 : i32
    %c0_i32_0 = arith.constant 0 : i32
    return %arg0, %c0_i32 : i32, i32
  }
}

</mosaic_0001>

<llo_original>
// kernel: tpu_custom_call.1
$region0: #{tpu_custom_call.1}
  #allocation0 [shape = 'u32[]', space=smem, size = 0x4, offset = 0x4, fixed_abs, tag = 'smem constant byte address 0x4 - core index']
  #allocation1 [shape = 'u32[72,128]{1,0:T(1,128)}', space=vmem, size = 0x9000, scoped, tag = 'internal scratch']
  %s0 = inlined_call_operand.vmem [shape: f32[16,32], index: 0, kind: input, shape index: {}]
  %s1 = inlined_call_operand.vmem [shape: f32[1,32], index: 1, kind: input, shape index: {}]
  %s2 = inlined_call_operand.vmem [shape: f32[1,32], index: 2, kind: input, shape index: {}]
  %s3 = inlined_call_operand.vmem [shape: bf16[32,96], index: 3, kind: input, shape index: {}]
  %s4 = inlined_call_operand.vmem [shape: bf16[32,32], index: 4, kind: input, shape index: {}]
  %s5 = inlined_call_operand.vmem [shape: f32[1,32], index: 5, kind: input, shape index: {}]
  %s6 = inlined_call_operand.vmem [shape: f32[1,32], index: 6, kind: input, shape index: {}]
  %s7 = inlined_call_operand.vmem [shape: f32[1,32], index: 7, kind: input, shape index: {}]
  %s8 = inlined_call_operand.vmem [shape: bf16[32,128], index: 8, kind: input, shape index: {}]
  %s9 = inlined_call_operand.vmem [shape: f32[1,128], index: 9, kind: input, shape index: {}]
  %s10 = inlined_call_operand.vmem [shape: bf16[128,32], index: 10, kind: input, shape index: {}]
  %s11 = inlined_call_operand.vmem [shape: f32[1,32], index: 11, kind: input, shape index: {}]
  %s12 = inlined_call_operand.hbm [shape: f32[16,32], index: 12, kind: output, shape index: {}]
  %s13 = sld [smem:[#allocation0]]
  $region81: #{tpu_custom_call.1} parent=0
    _
  %s15 = ssub.s32 1, %s13
  %s16 = scalar_select 0, %s15, %s13
  $region1: #{tpu_custom_call.1} parent=0
    #allocation2 [shape = 'u8[8192]{0}', space=vmem, size = 0x2000, scoped, tag = 'output window, operand 0']
    #allocation3 [shape = 's32[2]{0}', space=sflag, size = 0x8, scoped, tag = 'scoped memory for tpu_custom_call.1']
    %17 = vsyncpa [#allocation3], 0
    %s18 = scalar_lea.sflag [#allocation3], 1
    %19 = vsyncpa %s18, 0
    loop: start=0, step=1, limit=4
    $region2: #{tpu_custom_call.1} parent=1 // loop_pre_header
      _
    $region3: #{tpu_custom_call.1} parent=1 // loop_header
      %s21 = sphi 0, %s25
      %p22 = scmp.ge.s32.totalorder %s21, 4
      %s31 = sphi 0, %s33
      %s34 = sphi 0, %s31
      %s35 = sphi 0, %s34
      %s51 = sphi 0, %s35
      %s55 = sphi 0, %s55
      %s57 = sphi 0, %s55
      %s58 = sphi 0, %s57
      %s72 = sphi 0, %s58
      %s76 = sphi 0, %s76
      %s78 = sphi 0, %s76
      %s79 = sphi 0, %s78
      %s93 = sphi 0, %s79
      %s97 = sphi 0, %s97
      %s99 = sphi 0, %s97
      %s100 = sphi 0, %s99
      %s114 = sphi 0, %s100
      %s118 = sphi 0, %s118
      %s120 = sphi 0, %s118
      %s121 = sphi 0, %s120
      %s135 = sphi 0, %s121
      %s139 = sphi 0, %s139
      %s141 = sphi 0, %s139
      %s142 = sphi 0, %s141
      %s156 = sphi 0, %s142
      %s160 = sphi 0, %s160
      %s162 = sphi 0, %s160
      %s163 = sphi 0, %s162
      %s177 = sphi 0, %s163
      %s181 = sphi 0, %s181
      %s183 = sphi 0, %s181
      %s184 = sphi 0, %s183
      %s198 = sphi 0, %s184
      %s202 = sphi 0, %s202
      %s204 = sphi 0, %s202
      %s205 = sphi 0, %s204
      %s219 = sphi 0, %s205
      %s223 = sphi 0, %s223
      %s225 = sphi 0, %s223
      %s226 = sphi 0, %s225
      %s240 = sphi 0, %s226
      %s244 = sphi 0, %s244
      %s246 = sphi 0, %s244
      %s247 = sphi 0, %s246
      %s261 = sphi 0, %s247
      %s265 = sphi 0, %s265
      %s267 = sphi 0, %s265
      %s268 = sphi 0, %s267
      %s282 = sphi 0, %s268
      %s288 = sphi 0, %s290
      %s291 = sphi 0, %s288
      %s292 = sphi 0, %s291
      %s308 = sphi 0, %s292
    $region4: #{tpu_custom_call.1} parent=1 // loop_header_branch
      %24 = sbr.rel (%p22) target = $region8
    $region5: #{tpu_custom_call.1} parent=1 // loop_body
      %s26 = ssub.s32 %s21, 1
      %s27 = ssub.s32 %s21, 2
      %s28 = sadd.s32 %s21, 1
      %s29 = ssub.s32 %s21, %s28
      %p30 = scmp.eq.s32.totalorder %s29, 0
      %s32 = sadd.s32 %s31, 1
      %s33 = scalar_select %p30, %s31, %s32
      %p36 = pneg %p30
      %p37 = scmp.eq.s32.totalorder %s21, 1
      %p38 = por %p36, %p37
      %p39 = scmp.ne.s32.totalorder %s31, %s34
      %p40 = scmp.eq.s32.totalorder %s21, 0
      %p41 = por %p39, %p40
      %p42 = scmp.ne.s32.totalorder %s31, %s34
      %p43 = scmp.eq.s32.totalorder %s26, 1
      %p44 = por %p42, %p43
      %p45 = scmp.ne.s32.totalorder %s34, %s35
      %p46 = scmp.eq.s32.totalorder %s26, 0
      %p47 = por %p45, %p46
      %p48 = scmp.ne.s32.totalorder %s34, %s35
      %p49 = scmp.eq.s32.totalorder %s27, 1
      %p50 = por %p48, %p49
      %p52 = scmp.ne.s32.totalorder %s35, %s51
      %p53 = scmp.eq.s32.totalorder %s27, 0
      %p54 = por %p52, %p53
      %s56 = sadd.s32 %s55, 1
      %p59 = scmp.eq.s32.totalorder %s21, 1
      %p60 = scmp.ne.s32.totalorder %s55, %s57
      %p61 = scmp.eq.s32.totalorder %s21, 0
      %p62 = por %p60, %p61
      %p63 = scmp.ne.s32.totalorder %s55, %s57
      %p64 = scmp.eq.s32.totalorder %s26, 1
      %p65 = por %p63, %p64
      %p66 = scmp.ne.s32.totalorder %s57, %s58
      %p67 = scmp.eq.s32.totalorder %s26, 0
      %p68 = por %p66, %p67
      %p69 = scmp.ne.s32.totalorder %s57, %s58
      %p70 = scmp.eq.s32.totalorder %s27, 1
      %p71 = por %p69, %p70
      %p73 = scmp.ne.s32.totalorder %s58, %s72
      %p74 = scmp.eq.s32.totalorder %s27, 0
      %p75 = por %p73, %p74
      %s77 = sadd.s32 %s76, 1
      %p80 = scmp.eq.s32.totalorder %s21, 1
      %p81 = scmp.ne.s32.totalorder %s76, %s78
      %p82 = scmp.eq.s32.totalorder %s21, 0
      %p83 = por %p81, %p82
      %p84 = scmp.ne.s32.totalorder %s76, %s78
      %p85 = scmp.eq.s32.totalorder %s26, 1
      %p86 = por %p84, %p85
      %p87 = scmp.ne.s32.totalorder %s78, %s79
      %p88 = scmp.eq.s32.totalorder %s26, 0
      %p89 = por %p87, %p88
      %p90 = scmp.ne.s32.totalorder %s78, %s79
      %p91 = scmp.eq.s32.totalorder %s27, 1
      %p92 = por %p90, %p91
      %p94 = scmp.ne.s32.totalorder %s79, %s93
      %p95 = scmp.eq.s32.totalorder %s27, 0
      %p96 = por %p94, %p95
      %s98 = sadd.s32 %s97, 1
      %p101 = scmp.eq.s32.totalorder %s21, 1
      %p102 = scmp.ne.s32.totalorder %s97, %s99
      %p103 = scmp.eq.s32.totalorder %s21, 0
      %p104 = por %p102, %p103
      %p105 = scmp.ne.s32.totalorder %s97, %s99
      %p106 = scmp.eq.s32.totalorder %s26, 1
      %p107 = por %p105, %p106
      %p108 = scmp.ne.s32.totalorder %s99, %s100
      %p109 = scmp.eq.s32.totalorder %s26, 0
      %p110 = por %p108, %p109
      %p111 = scmp.ne.s32.totalorder %s99, %s100
      %p112 = scmp.eq.s32.totalorder %s27, 1
      %p113 = por %p111, %p112
      %p115 = scmp.ne.s32.totalorder %s100, %s114
      %p116 = scmp.eq.s32.totalorder %s27, 0
      %p117 = por %p115, %p116
      %s119 = sadd.s32 %s118, 1
      %p122 = scmp.eq.s32.totalorder %s21, 1
      %p123 = scmp.ne.s32.totalorder %s118, %s120
      %p124 = scmp.eq.s32.totalorder %s21, 0
      %p125 = por %p123, %p124
      %p126 = scmp.ne.s32.totalorder %s118, %s120
      %p127 = scmp.eq.s32.totalorder %s26, 1
      %p128 = por %p126, %p127
      %p129 = scmp.ne.s32.totalorder %s120, %s121
      %p130 = scmp.eq.s32.totalorder %s26, 0
      %p131 = por %p129, %p130
      %p132 = scmp.ne.s32.totalorder %s120, %s121
      %p133 = scmp.eq.s32.totalorder %s27, 1
      %p134 = por %p132, %p133
      %p136 = scmp.ne.s32.totalorder %s121, %s135
      %p137 = scmp.eq.s32.totalorder %s27, 0
      %p138 = por %p136, %p137
      %s140 = sadd.s32 %s139, 1
      %p143 = scmp.eq.s32.totalorder %s21, 1
      %p144 = scmp.ne.s32.totalorder %s139, %s141
      %p145 = scmp.eq.s32.totalorder %s21, 0
      %p146 = por %p144, %p145
      %p147 = scmp.ne.s32.totalorder %s139, %s141
      %p148 = scmp.eq.s32.totalorder %s26, 1
      %p149 = por %p147, %p148
      %p150 = scmp.ne.s32.totalorder %s141, %s142
      %p151 = scmp.eq.s32.totalorder %s26, 0
      %p152 = por %p150, %p151
      %p153 = scmp.ne.s32.totalorder %s141, %s142
      %p154 = scmp.eq.s32.totalorder %s27, 1
      %p155 = por %p153, %p154
      %p157 = scmp.ne.s32.totalorder %s142, %s156
      %p158 = scmp.eq.s32.totalorder %s27, 0
      %p159 = por %p157, %p158
      %s161 = sadd.s32 %s160, 1
      %p164 = scmp.eq.s32.totalorder %s21, 1
      %p165 = scmp.ne.s32.totalorder %s160, %s162
      %p166 = scmp.eq.s32.totalorder %s21, 0
      %p167 = por %p165, %p166
      %p168 = scmp.ne.s32.totalorder %s160, %s162
      %p169 = scmp.eq.s32.totalorder %s26, 1
      %p170 = por %p168, %p169
      %p171 = scmp.ne.s32.totalorder %s162, %s163
      %p172 = scmp.eq.s32.totalorder %s26, 0
      %p173 = por %p171, %p172
      %p174 = scmp.ne.s32.totalorder %s162, %s163
      %p175 = scmp.eq.s32.totalorder %s27, 1
      %p176 = por %p174, %p175
      %p178 = scmp.ne.s32.totalorder %s163, %s177
      %p179 = scmp.eq.s32.totalorder %s27, 0
      %p180 = por %p178, %p179
      %s182 = sadd.s32 %s181, 1
      %p185 = scmp.eq.s32.totalorder %s21, 1
      %p186 = scmp.ne.s32.totalorder %s181, %s183
      %p187 = scmp.eq.s32.totalorder %s21, 0
      %p188 = por %p186, %p187
      %p189 = scmp.ne.s32.totalorder %s181, %s183
      %p190 = scmp.eq.s32.totalorder %s26, 1
      %p191 = por %p189, %p190
      %p192 = scmp.ne.s32.totalorder %s183, %s184
      %p193 = scmp.eq.s32.totalorder %s26, 0
      %p194 = por %p192, %p193
      %p195 = scmp.ne.s32.totalorder %s183, %s184
      %p196 = scmp.eq.s32.totalorder %s27, 1
      %p197 = por %p195, %p196
      %p199 = scmp.ne.s32.totalorder %s184, %s198
      %p200 = scmp.eq.s32.totalorder %s27, 0
      %p201 = por %p199, %p200
      %s203 = sadd.s32 %s202, 1
      %p206 = scmp.eq.s32.totalorder %s21, 1
      %p207 = scmp.ne.s32.totalorder %s202, %s204
      %p208 = scmp.eq.s32.totalorder %s21, 0
      %p209 = por %p207, %p208
      %p210 = scmp.ne.s32.totalorder %s202, %s204
      %p211 = scmp.eq.s32.totalorder %s26, 1
      %p212 = por %p210, %p211
      %p213 = scmp.ne.s32.totalorder %s204, %s205
      %p214 = scmp.eq.s32.totalorder %s26, 0
      %p215 = por %p213, %p214
      %p216 = scmp.ne.s32.totalorder %s204, %s205
      %p217 = scmp.eq.s32.totalorder %s27, 1
      %p218 = por %p216, %p217
      %p220 = scmp.ne.s32.totalorder %s205, %s219
      %p221 = scmp.eq.s32.totalorder %s27, 0
      %p222 = por %p220, %p221
      %s224 = sadd.s32 %s223, 1
      %p227 = scmp.eq.s32.totalorder %s21, 1
      %p228 = scmp.ne.s32.totalorder %s223, %s225
      %p229 = scmp.eq.s32.totalorder %s21, 0
      %p230 = por %p228, %p229
      %p231 = scmp.ne.s32.totalorder %s223, %s225
      %p232 = scmp.eq.s32.totalorder %s26, 1
      %p233 = por %p231, %p232
      %p234 = scmp.ne.s32.totalorder %s225, %s226
      %p235 = scmp.eq.s32.totalorder %s26, 0
      %p236 = por %p234, %p235
      %p237 = scmp.ne.s32.totalorder %s225, %s226
      %p238 = scmp.eq.s32.totalorder %s27, 1
      %p239 = por %p237, %p238
      %p241 = scmp.ne.s32.totalorder %s226, %s240
      %p242 = scmp.eq.s32.totalorder %s27, 0
      %p243 = por %p241, %p242
      %s245 = sadd.s32 %s244, 1
      %p248 = scmp.eq.s32.totalorder %s21, 1
      %p249 = scmp.ne.s32.totalorder %s244, %s246
      %p250 = scmp.eq.s32.totalorder %s21, 0
      %p251 = por %p249, %p250
      %p252 = scmp.ne.s32.totalorder %s244, %s246
      %p253 = scmp.eq.s32.totalorder %s26, 1
      %p254 = por %p252, %p253
      %p255 = scmp.ne.s32.totalorder %s246, %s247
      %p256 = scmp.eq.s32.totalorder %s26, 0
      %p257 = por %p255, %p256
      %p258 = scmp.ne.s32.totalorder %s246, %s247
      %p259 = scmp.eq.s32.totalorder %s27, 1
      %p260 = por %p258, %p259
      %p262 = scmp.ne.s32.totalorder %s247, %s261
      %p263 = scmp.eq.s32.totalorder %s27, 0
      %p264 = por %p262, %p263
      %s266 = sadd.s32 %s265, 1
      %p269 = scmp.eq.s32.totalorder %s21, 1
      %p270 = scmp.ne.s32.totalorder %s265, %s267
      %p271 = scmp.eq.s32.totalorder %s21, 0
      %p272 = por %p270, %p271
      %p273 = scmp.ne.s32.totalorder %s265, %s267
      %p274 = scmp.eq.s32.totalorder %s26, 1
      %p275 = por %p273, %p274
      %p276 = scmp.ne.s32.totalorder %s267, %s268
      %p277 = scmp.eq.s32.totalorder %s26, 0
      %p278 = por %p276, %p277
      %p279 = scmp.ne.s32.totalorder %s267, %s268
      %p280 = scmp.eq.s32.totalorder %s27, 1
      %p281 = por %p279, %p280
      %p283 = scmp.ne.s32.totalorder %s268, %s282
      %p284 = scmp.eq.s32.totalorder %s27, 0
      %p285 = por %p283, %p284
      %s286 = ssub.s32 %s21, %s28
      %p287 = scmp.eq.s32.totalorder %s286, 0
      %s289 = sadd.s32 %s288, 1
      %s290 = scalar_select %p287, %s288, %s289
      %p293 = pneg %p287
      %p294 = scmp.eq.s32.totalorder %s21, 1
      %p295 = por %p293, %p294
      %p296 = scmp.ne.s32.totalorder %s288, %s291
      %p297 = scmp.eq.s32.totalorder %s21, 0
      %p298 = por %p296, %p297
      %p299 = scmp.ne.s32.totalorder %s288, %s291
      %p300 = scmp.eq.s32.totalorder %s26, 1
      %p301 = por %p299, %p300
      %p302 = scmp.ne.s32.totalorder %s291, %s292
      %p303 = scmp.eq.s32.totalorder %s26, 0
      %p304 = por %p302, %p303
      %p305 = scmp.ne.s32.totalorder %s291, %s292
      %p306 = scmp.eq.s32.totalorder %s27, 1
      %p307 = por %p305, %p306
      %p309 = scmp.ne.s32.totalorder %s292, %s308
      %p310 = scmp.eq.s32.totalorder %s27, 0
      %p311 = por %p309, %p310
      %p312 = scmp.le.s32.totalorder 1, %s21
      %p313 = scmp.lt.s32.totalorder %s21, 3
      %p314 = pnand %p312, %p313
      %p315 = pneg %p314
      // Predicated region
      $region9: #{tpu_custom_call.1} parent=5 // pred_check
        _
      $region10: #{tpu_custom_call.1} parent=5 // pred_check_branch
        %317 = sbr.rel (%p314) target = $region12
      $region11: #{tpu_custom_call.1} parent=5 // pred_region
        %s318 = ssub.s32 %s21, 1
        // Predicated region
        $region13: #{tpu_custom_call.1} parent=11 // pred_check
          %p319 = pneg %p68
        $region14: #{tpu_custom_call.1} parent=11 // pred_check_branch
          %321 = sbr.rel (%p319) target = $region16
        $region15: #{tpu_custom_call.1} parent=11 // pred_region
          _
        $region16: #{tpu_custom_call.1} parent=11 // pred_fallthru
          _
        // Predicated region
        $region17: #{tpu_custom_call.1} parent=11 // pred_check
          %p322 = pneg %p89
        $region18: #{tpu_custom_call.1} parent=11 // pred_check_branch
          %324 = sbr.rel (%p322) target = $region20
        $region19: #{tpu_custom_call.1} parent=11 // pred_region
          _
        $region20: #{tpu_custom_call.1} parent=11 // pred_fallthru
          _
        // Predicated region
        $region21: #{tpu_custom_call.1} parent=11 // pred_check
          %p325 = pneg %p110
        $region22: #{tpu_custom_call.1} parent=11 // pred_check_branch
          %327 = sbr.rel (%p325) target = $region24
        $region23: #{tpu_custom_call.1} parent=11 // pred_region
          _
        $region24: #{tpu_custom_call.1} parent=11 // pred_fallthru
          _
        // Predicated region
        $region25: #{tpu_custom_call.1} parent=11 // pred_check
          %p328 = pneg %p131
        $region26: #{tpu_custom_call.1} parent=11 // pred_check_branch
          %330 = sbr.rel (%p328) target = $region28
        $region27: #{tpu_custom_call.1} parent=11 // pred_region
          _
        $region28: #{tpu_custom_call.1} parent=11 // pred_fallthru
          _
        // Predicated region
        $region29: #{tpu_custom_call.1} parent=11 // pred_check
          %p331 = pneg %p152
        $region30: #{tpu_custom_call.1} parent=11 // pred_check_branch
          %333 = sbr.rel (%p331) target = $region32
        $region31: #{tpu_custom_call.1} parent=11 // pred_region
          _
        $region32: #{tpu_custom_call.1} parent=11 // pred_fallthru
          _
        // Predicated region
        $region33: #{tpu_custom_call.1} parent=11 // pred_check
          %p334 = pneg %p173
        $region34: #{tpu_custom_call.1} parent=11 // pred_check_branch
          %336 = sbr.rel (%p334) target = $region36
        $region35: #{tpu_custom_call.1} parent=11 // pred_region
          _
        $region36: #{tpu_custom_call.1} parent=11 // pred_fallthru
          _
        // Predicated region
        $region37: #{tpu_custom_call.1} parent=11 // pred_check
          %p337 = pneg %p194
        $region38: #{tpu_custom_call.1} parent=11 // pred_check_branch
          %339 = sbr.rel (%p337) target = $region40
        $region39: #{tpu_custom_call.1} parent=11 // pred_region
          _
        $region40: #{tpu_custom_call.1} parent=11 // pred_fallthru
          _
        // Predicated region
        $region41: #{tpu_custom_call.1} parent=11 // pred_check
          %p340 = pneg %p215
        $region42: #{tpu_custom_call.1} parent=11 // pred_check_branch
          %342 = sbr.rel (%p340) target = $region44
        $region43: #{tpu_custom_call.1} parent=11 // pred_region
          _
        $region44: #{tpu_custom_call.1} parent=11 // pred_fallthru
          _
        // Predicated region
        $region45: #{tpu_custom_call.1} parent=11 // pred_check
          %p343 = pneg %p236
        $region46: #{tpu_custom_call.1} parent=11 // pred_check_branch
          %345 = sbr.rel (%p343) target = $region48
        $region47: #{tpu_custom_call.1} parent=11 // pred_region
          _
        $region48: #{tpu_custom_call.1} parent=11 // pred_fallthru
          _
        // Predicated region
        $region49: #{tpu_custom_call.1} parent=11 // pred_check
          %p346 = pneg %p257
        $region50: #{tpu_custom_call.1} parent=11 // pred_check_branch
          %348 = sbr.rel (%p346) target = $region52
        $region51: #{tpu_custom_call.1} parent=11 // pred_region
          _
        $region52: #{tpu_custom_call.1} parent=11 // pred_fallthru
          _
        // Predicated region
        $region53: #{tpu_custom_call.1} parent=11 // pred_check
          %p349 = pneg %p278
        $region54: #{tpu_custom_call.1} parent=11 // pred_check_branch
          %351 = sbr.rel (%p349) target = $region56
        $region55: #{tpu_custom_call.1} parent=11 // pred_region
          _
        $region56: #{tpu_custom_call.1} parent=11 // pred_fallthru
          _
      $region12: #{tpu_custom_call.1} parent=5 // pred_fallthru
        _
      %p352 = scmp.lt.s32.totalorder %s21, 2
      // Predicated region
      $region57: #{tpu_custom_call.1} parent=5 // pred_check
        %p353 = pneg %p352
      $region58: #{tpu_custom_call.1} parent=5 // pred_check_branch
        %355 = sbr.rel (%p353) target = $region60
      $region59: #{tpu_custom_call.1} parent=5 // pred_region
        // Predicated region
        $region61: #{tpu_custom_call.1} parent=59 // pred_check
          %p356 = pneg %p41
        $region62: #{tpu_custom_call.1} parent=59 // pred_check_branch
          %358 = sbr.rel (%p356) target = $region64
        $region63: #{tpu_custom_call.1} parent=59 // pred_region
          %p359 = scmp.lt.s32.totalorder %s21, 1
          %s360 = scalar_select %p359, %s21, 1
          %s361 = smul.addr %s360, 8
          %s362 = scalar_lea.vmem %s0, %s361
        $region64: #{tpu_custom_call.1} parent=59 // pred_fallthru
          _
      $region60: #{tpu_custom_call.1} parent=5 // pred_fallthru
        _
      %p363 = scmp.le.s32.totalorder 1, %s21
      %p364 = scmp.lt.s32.totalorder %s21, 3
      %p365 = pnand %p363, %p364
      %p366 = pneg %p365
      // Predicated region
      $region65: #{tpu_custom_call.1} parent=5 // pred_check
        _
      $region66: #{tpu_custom_call.1} parent=5 // pred_check_branch
        %368 = sbr.rel (%p365) target = $region68
      $region67: #{tpu_custom_call.1} parent=5 // pred_region
        %s369 = ssub.s32 %s21, 1
        %p370 = scmp.lt.s32.totalorder %s26, 1
        %s371 = scalar_select %p370, %s26, 1
        %s372 = smul.addr %s371, 8
        %s373 = scalar_lea.vmem %s0, %s372
        %p374 = pneg %p47
        %p375 = pneg %p44
        %p376 = pneg %p68
        %p377 = pneg %p65
        %p378 = pneg %p89
        %p379 = pneg %p86
        %p380 = pneg %p110
        %p381 = pneg %p107
        %p382 = pneg %p131
        %p383 = pneg %p128
        %p384 = pneg %p152
        %p385 = pneg %p149
        %p386 = pneg %p173
        %p387 = pneg %p170
        %p388 = pneg %p194
        %p389 = pneg %p191
        %p390 = pneg %p215
        %p391 = pneg %p212
        %p392 = pneg %p236
        %p393 = pneg %p233
        %p394 = pneg %p257
        %p395 = pneg %p254
        %p396 = pneg %p278
        %p397 = pneg %p275
        %p398 = pneg %p304
        %p399 = pneg %p301
        %s400 = sand.u32 %s291, 1
        %s401 = scalar_lea.sflag [#allocation3], %s400
        %s402 = sand.u32 %s291, 1
        %s403 = smul.addr %s402, 8
        %s404 = scalar_lea.vmem [#allocation2], %s403
        %p405 = scmp.lt.s32.totalorder %s26, 1
        %s406 = scalar_select %p405, %s26, 1
        %s407 = smul.addr %s406, 8
        %s408 = scalar_lea.vmem %s0, %s407
        %v410 = vld [vmem:[%s408] sm:$0xff]
        %v411 = vld [vmem:[%s1] sm:$0x1]
        %v412 = vld [vmem:[%s2] sm:$0x1]
        %vm413 = vcmask 261120
        %v414 = vsel %vm413, %v410, 0.0
        %415 = vadd.xlane.f32.xlu0 %v414
        %v416 = vpop.xlane.xlu0 %415
        %v417 = vrcp.pop 32.0
        %v418 = vmul.f32 32.0, %v417
        %v419 = vsub.f32 1.0, %v418
        %v420 = vmul.f32 %v417, %v419
        %v421 = vadd.f32 %v417, %v420
        %vm422 = vweird.f32 %v417
        %v423 = vsel %vm422, %v417, %v421
        %v424 = vmul.f32 %v416, %v423
        %v425 = vsub.f32 %v410, %v424
        %v426 = vmul.f32 %v425, %v425
        %v427 = vsel %vm413, %v426, 0.0
        %428 = vadd.xlane.f32.xlu0 %v427
        %v429 = vpop.xlane.xlu0 %428
        %v430 = vmul.f32 %v429, %v423
        %v431 = vadd.f32 %v430, 1e-05
        %v432 = vrsqrt.pop %v431
        %v433 = vmul.f32 %v432, %v431
        %v434 = vmul.f32 %v433, %v432
        %v435 = vmul.f32 0.5, %v434
        %v436 = vsub.f32 1.5, %v435
        %v437 = vmul.f32 %v432, %v436
        %vm438 = vweird.f32 %v431
        %vm439 = vweird.f32 %v432
        %vm440 = vmor %vm438, %vm439
        %v441 = vsel %vm440, %v432, %v437
        %v442 = vmul.f32 %v425, %v441
        %v444 = vperm.slane %v411, 0
        %v446 = vmul.f32 %v442, %v444
        %v448 = vperm.slane %v412, 0
        %v450 = vadd.f32 %v446, %v448
        %v451 = vpack.c.bf16 %v450, %v450
        %v452 = vld [vmem:[%s3] sm:$0xf]
        %v453 = vld [vmem:[%s3 + $0x4] sm:$0xf]
        %v454 = vld [vmem:[%s3 + $0x8] sm:$0xf]
        %v455 = vld [vmem:[%s3 + $0xc] sm:$0xf]
        %v460 = vunpack.c.l.b16 %v452
        %v461 = vunpack.c.l.b16 %v453
        %v462 = vunpack.c.l.b16 %v454
        %v463 = vunpack.c.l.b16 %v455
        %v464 = vpack.c.b16 %v461, %v460
        %v465 = vpack.c.b16 %v463, %v462
        %v469 = vsel %vm413, %v451, 0
        %471 = vmatpush.bf16.msra.mxu0 0
        %472 = vmatpush.bf16.msra.mxu0 0
        %473 = vmatpush.bf16.msra.mxu0 0
        %474 = vmatpush.bf16.msra.mxu0 0
        %475 = vmatpush.bf16.msra.mxu0 0
        %476 = vmatpush.bf16.msra.mxu0 0
        %477 = vmatpush.bf16.msra.mxu0 %v465
        %478 = vmatpush.bf16.msra.mxu0 %v464
        %479 = vmatmul.bf16.gmra.mxu0 %v469
        %v480 = vpop.f32.mrf.mxu0
        %v481 = vadd.f32 0.0, %v480
        %v482 = vpop.f32.mrf.mxu0
        %483 = vdwg.mxu0
        %v484 = vlaneseq
        %v485 = vshrl.u32 %v484, 7
        %v486 = vlaneseq
        %v487 = vand.u32 %v486, 127
        %vm488 = vcmp.ge.s32.totalorder %v485, %v487
        %v489 = vsel %vm488, 0.0, -1e+30
        %v490 = vpack.c.bf16 %v481, %v481
        %v492 = vunpack.c.l.b16 %v490
        %v493 = vpack.c.b16 %v492, %v492
        %494 = vrot.lane.b32.xlu0 %v493, 96
        %v495 = vpop.permute.xlu0 %494
        %vm496 = vcmask 64512
        %v498 = vsel %vm496, %v490, 0
        %v501 = vsel %vm496, %v495, 0
        %503 = vmatpush.bf16.xpose.msra.mxu0 0
        %504 = vmatpush.bf16.xpose.msra.mxu0 0
        %505 = vmatpush.bf16.xpose.msra.mxu0 0
        %506 = vmatpush.bf16.xpose.msra.mxu0 0
        %507 = vmatpush.bf16.xpose.msra.mxu0 0
        %508 = vmatpush.bf16.xpose.msra.mxu0 0
        %509 = vmatpush.bf16.xpose.msra.mxu0 0
        %510 = vmatpush.bf16.xpose.msra.mxu0 %v501
        %511 = vmatmul.bf16.gmra.mxu0 %v498
        %v512 = vpop.f32.mrf.mxu0
        %v513 = vadd.f32 %v489, %v512
        %v514 = vpop.f32.mrf.mxu0
        %515 = vdwg.mxu0
        %v516 = vsel %vm496, %v513, -inf
        %517 = vmax.xlane.f32.xlu0 %v516
        %v518 = vpop.xlane.xlu0 %517
        %v519 = vsub.f32 %v513, %v518
        %v520 = vmul.f32 %v519, 1.442695
        %v521 = vpow.pop %v520
        %v522 = vsel %vm496, %v521, 0.0
        %523 = vadd.xlane.f32.xlu0 %v522
        %v524 = vpop.xlane.xlu0 %523
        %v525 = vrcp.pop %v524
        %v526 = vmul.f32 %v521, %v525
        %v527 = vpack.c.bf16 %v526, %v526
        %528 = vrot.lane.b32.xlu0 %v493, 64
        %v529 = vpop.permute.xlu0 %528
        %v531 = vsel %vm496, %v527, 0
        %vm533 = vcmask 1043456
        %v535 = vsel %vm533, %v529, 0
        %537 = vmatpush.bf16.msra.mxu0 0
        %538 = vmatpush.bf16.msra.mxu0 0
        %539 = vmatpush.bf16.msra.mxu0 0
        %540 = vmatpush.bf16.msra.mxu0 0
        %541 = vmatpush.bf16.msra.mxu0 0
        %542 = vmatpush.bf16.msra.mxu0 0
        %543 = vmatpush.bf16.msra.mxu0 0
        %544 = vmatpush.bf16.msra.mxu0 %v535
        %545 = vmatmul.bf16.gmra.mxu0 %v531
        %v546 = vpop.f32.mrf.mxu0
        %v547 = vadd.f32 0.0, %v546
        %v548 = vpop.f32.mrf.mxu0
        %549 = vdwg.mxu0
        %550 = vrot.lane.b32.xlu0 %v493, 120
        %v551 = vpop.permute.xlu0 %550
        %552 = vrot.lane.b32.xlu0 %v493, 88
        %v553 = vpop.permute.xlu0 %552
        %v555 = vsel %vm496, %v551, 0
        %v558 = vsel %vm496, %v553, 0
        %560 = vmatpush.bf16.xpose.msra.mxu0 0
        %561 = vmatpush.bf16.xpose.msra.mxu0 0
        %562 = vmatpush.bf16.xpose.msra.mxu0 0
        %563 = vmatpush.bf16.xpose.msra.mxu0 0
        %564 = vmatpush.bf16.xpose.msra.mxu0 0
        %565 = vmatpush.bf16.xpose.msra.mxu0 0
        %566 = vmatpush.bf16.xpose.msra.mxu0 0
        %567 = vmatpush.bf16.xpose.msra.mxu0 %v558
        %568 = vmatmul.bf16.gmra.mxu0 %v555
        %v569 = vpop.f32.mrf.mxu0
        %v570 = vadd.f32 %v489, %v569
        %v571 = vpop.f32.mrf.mxu0
        %572 = vdwg.mxu0
        %v573 = vsel %vm496, %v570, -inf
        %574 = vmax.xlane.f32.xlu0 %v573
        %v575 = vpop.xlane.xlu0 %574
        %v576 = vsub.f32 %v570, %v575
        %v577 = vmul.f32 %v576, 1.442695
        %v578 = vpow.pop %v577
        %v579 = vsel %vm496, %v578, 0.0
        %580 = vadd.xlane.f32.xlu0 %v579
        %v581 = vpop.xlane.xlu0 %580
        %v582 = vrcp.pop %v581
        %v583 = vmul.f32 %v578, %v582
        %v584 = vpack.c.bf16 %v583, %v583
        %585 = vrot.lane.b32.xlu0 %v493, 56
        %v586 = vpop.permute.xlu0 %585
        %v588 = vsel %vm496, %v584, 0
        %v591 = vsel %vm533, %v586, 0
        %593 = vmatpush.bf16.msra.mxu0 0
        %594 = vmatpush.bf16.msra.mxu0 0
        %595 = vmatpush.bf16.msra.mxu0 0
        %596 = vmatpush.bf16.msra.mxu0 0
        %597 = vmatpush.bf16.msra.mxu0 0
        %598 = vmatpush.bf16.msra.mxu0 0
        %599 = vmatpush.bf16.msra.mxu0 0
        %600 = vmatpush.bf16.msra.mxu0 %v591
        %601 = vmatmul.bf16.gmra.mxu0 %v588
        %v602 = vpop.f32.mrf.mxu0
        %v603 = vadd.f32 0.0, %v602
        %v604 = vpop.f32.mrf.mxu0
        %605 = vdwg.mxu0
        %606 = vrot.lane.b32.xlu0 %v493, 112
        %v607 = vpop.permute.xlu0 %606
        %608 = vrot.lane.b32.xlu0 %v493, 80
        %v609 = vpop.permute.xlu0 %608
        %v611 = vsel %vm496, %v607, 0
        %v614 = vsel %vm496, %v609, 0
        %616 = vmatpush.bf16.xpose.msra.mxu0 0
        %617 = vmatpush.bf16.xpose.msra.mxu0 0
        %618 = vmatpush.bf16.xpose.msra.mxu0 0
        %619 = vmatpush.bf16.xpose.msra.mxu0 0
        %620 = vmatpush.bf16.xpose.msra.mxu0 0
        %621 = vmatpush.bf16.xpose.msra.mxu0 0
        %622 = vmatpush.bf16.xpose.msra.mxu0 0
        %623 = vmatpush.bf16.xpose.msra.mxu0 %v614
        %624 = vmatmul.bf16.gmra.mxu0 %v611
        %v625 = vpop.f32.mrf.mxu0
        %v626 = vadd.f32 %v489, %v625
        %v627 = vpop.f32.mrf.mxu0
        %628 = vdwg.mxu0
        %v629 = vsel %vm496, %v626, -inf
        %630 = vmax.xlane.f32.xlu0 %v629
        %v631 = vpop.xlane.xlu0 %630
        %v632 = vsub.f32 %v626, %v631
        %v633 = vmul.f32 %v632, 1.442695
        %v634 = vpow.pop %v633
        %v635 = vsel %vm496, %v634, 0.0
        %636 = vadd.xlane.f32.xlu0 %v635
        %v637 = vpop.xlane.xlu0 %636
        %v638 = vrcp.pop %v637
        %v639 = vmul.f32 %v634, %v638
        %v640 = vpack.c.bf16 %v639, %v639
        %641 = vrot.lane.b32.xlu0 %v493, 48
        %v642 = vpop.permute.xlu0 %641
        %v644 = vsel %vm496, %v640, 0
        %v647 = vsel %vm533, %v642, 0
        %649 = vmatpush.bf16.msra.mxu0 0
        %650 = vmatpush.bf16.msra.mxu0 0
        %651 = vmatpush.bf16.msra.mxu0 0
        %652 = vmatpush.bf16.msra.mxu0 0
        %653 = vmatpush.bf16.msra.mxu0 0
        %654 = vmatpush.bf16.msra.mxu0 0
        %655 = vmatpush.bf16.msra.mxu0 0
        %656 = vmatpush.bf16.msra.mxu0 %v647
        %657 = vmatmul.bf16.gmra.mxu0 %v644
        %v658 = vpop.f32.mrf.mxu0
        %v659 = vadd.f32 0.0, %v658
        %v660 = vpop.f32.mrf.mxu0
        %661 = vdwg.mxu0
        %662 = vrot.lane.b32.xlu0 %v493, 104
        %v663 = vpop.permute.xlu0 %662
        %664 = vrot.lane.b32.xlu0 %v493, 72
        %v665 = vpop.permute.xlu0 %664
        %v667 = vsel %vm496, %v663, 0
        %v670 = vsel %vm496, %v665, 0
        %672 = vmatpush.bf16.xpose.msra.mxu0 0
        %673 = vmatpush.bf16.xpose.msra.mxu0 0
        %674 = vmatpush.bf16.xpose.msra.mxu0 0
        %675 = vmatpush.bf16.xpose.msra.mxu0 0
        %676 = vmatpush.bf16.xpose.msra.mxu0 0
        %677 = vmatpush.bf16.xpose.msra.mxu0 0
        %678 = vmatpush.bf16.xpose.msra.mxu0 0
        %679 = vmatpush.bf16.xpose.msra.mxu0 %v670
        %680 = vmatmul.bf16.gmra.mxu0 %v667
        %v681 = vpop.f32.mrf.mxu0
        %v682 = vadd.f32 %v489, %v681
        %v683 = vpop.f32.mrf.mxu0
        %684 = vdwg.mxu0
        %v685 = vsel %vm496, %v682, -inf
        %686 = vmax.xlane.f32.xlu0 %v685
        %v687 = vpop.xlane.xlu0 %686
        %v688 = vsub.f32 %v682, %v687
        %v689 = vmul.f32 %v688, 1.442695
        %v690 = vpow.pop %v689
        %v691 = vsel %vm496, %v690, 0.0
        %692 = vadd.xlane.f32.xlu0 %v691
        %v693 = vpop.xlane.xlu0 %692
        %v694 = vrcp.pop %v693
        %v695 = vmul.f32 %v690, %v694
        %v696 = vpack.c.bf16 %v695, %v695
        %697 = vrot.lane.b32.xlu0 %v493, 40
        %v698 = vpop.permute.xlu0 %697
        %v700 = vsel %vm496, %v696, 0
        %v703 = vsel %vm533, %v698, 0
        %705 = vmatpush.bf16.msra.mxu0 0
        %706 = vmatpush.bf16.msra.mxu0 0
        %707 = vmatpush.bf16.msra.mxu0 0
        %708 = vmatpush.bf16.msra.mxu0 0
        %709 = vmatpush.bf16.msra.mxu0 0
        %710 = vmatpush.bf16.msra.mxu0 0
        %711 = vmatpush.bf16.msra.mxu0 0
        %712 = vmatpush.bf16.msra.mxu0 %v703
        %713 = vmatmul.bf16.gmra.mxu0 %v700
        %v714 = vpop.f32.mrf.mxu0
        %v715 = vadd.f32 0.0, %v714
        %v716 = vpop.f32.mrf.mxu0
        %717 = vdwg.mxu0
        %719 = vrot.lane.b32.xlu0 %v603, 8
        %v720 = vpop.permute.xlu0 %719
        %723 = vrot.lane.b32.xlu0 %v659, 16
        %v724 = vpop.permute.xlu0 %723
        %727 = vrot.lane.b32.xlu0 %v715, 24
        %v728 = vpop.permute.xlu0 %727
        %v730 = vsel %vm496, %v547, %v720
        %vm731 = vcmask 130048
        %v732 = vsel %vm731, %v730, %v724
        %vm733 = vcmask 195584
        %v734 = vsel %vm733, %v732, %v728
        %v735 = vpack.c.bf16 %v734, %v734
        %v736 = vld [vmem:[%s4] sm:$0xf]
        %v737 = vld [vmem:[%s4 + $0x4] sm:$0xf]
        %v738 = vld [vmem:[%s4 + $0x8] sm:$0xf]
        %v739 = vld [vmem:[%s4 + $0xc] sm:$0xf]
        %v740 = vld [vmem:[%s5] sm:$0x1]
        %v742 = vperm.slane %v740, 0
        %v748 = vunpack.c.l.b16 %v736
        %v749 = vunpack.c.l.b16 %v737
        %v750 = vunpack.c.l.b16 %v738
        %v751 = vunpack.c.l.b16 %v739
        %v752 = vpack.c.b16 %v749, %v748
        %v753 = vpack.c.b16 %v751, %v750
        %v757 = vsel %vm413, %v735, 0
        %759 = vmatpush.bf16.msra.mxu0 0
        %760 = vmatpush.bf16.msra.mxu0 0
        %761 = vmatpush.bf16.msra.mxu0 0
        %762 = vmatpush.bf16.msra.mxu0 0
        %763 = vmatpush.bf16.msra.mxu0 0
        %764 = vmatpush.bf16.msra.mxu0 0
        %765 = vmatpush.bf16.msra.mxu0 %v753
        %766 = vmatpush.bf16.msra.mxu0 %v752
        %767 = vmatmul.bf16.gmra.mxu0 %v757
        %v768 = vpop.f32.mrf.mxu0
        %v769 = vadd.f32 %v742, %v768
        %v770 = vpop.f32.mrf.mxu0
        %771 = vdwg.mxu0
        %v772 = vadd.f32 %v410, %v769
        %v773 = vld [vmem:[%s6] sm:$0x1]
        %v774 = vld [vmem:[%s7] sm:$0x1]
        %v775 = vsel %vm413, %v772, 0.0
        %776 = vadd.xlane.f32.xlu0 %v775
        %v777 = vpop.xlane.xlu0 %776
        %v778 = vmul.f32 %v777, %v423
        %v779 = vsub.f32 %v772, %v778
        %v780 = vmul.f32 %v779, %v779
        %v781 = vsel %vm413, %v780, 0.0
        %782 = vadd.xlane.f32.xlu0 %v781
        %v783 = vpop.xlane.xlu0 %782
        %v784 = vmul.f32 %v783, %v423
        %v785 = vadd.f32 %v784, 1e-05
        %v786 = vrsqrt.pop %v785
        %v787 = vmul.f32 %v786, %v785
        %v788 = vmul.f32 %v787, %v786
        %v789 = vmul.f32 0.5, %v788
        %v790 = vsub.f32 1.5, %v789
        %v791 = vmul.f32 %v786, %v790
        %vm792 = vweird.f32 %v785
        %vm793 = vweird.f32 %v786
        %vm794 = vmor %vm792, %vm793
        %v795 = vsel %vm794, %v786, %v791
        %v796 = vmul.f32 %v779, %v795
        %v798 = vperm.slane %v773, 0
        %v800 = vmul.f32 %v796, %v798
        %v802 = vperm.slane %v774, 0
        %v804 = vadd.f32 %v800, %v802
        %v805 = vpack.c.bf16 %v804, %v804
        %v806 = vld [vmem:[%s8] sm:$0xf]
        %v807 = vld [vmem:[%s8 + $0x4] sm:$0xf]
        %v808 = vld [vmem:[%s8 + $0x8] sm:$0xf]
        %v809 = vld [vmem:[%s8 + $0xc] sm:$0xf]
        %v810 = vld [vmem:[%s9] sm:$0x1]
        %v812 = vperm.slane %v810, 0
        %v818 = vunpack.c.l.b16 %v806
        %v819 = vunpack.c.l.b16 %v807
        %v820 = vunpack.c.l.b16 %v808
        %v821 = vunpack.c.l.b16 %v809
        %v822 = vpack.c.b16 %v819, %v818
        %v823 = vpack.c.b16 %v821, %v820
        %v827 = vsel %vm413, %v805, 0
        %829 = vmatpush.bf16.msra.mxu0 0
        %830 = vmatpush.bf16.msra.mxu0 0
        %831 = vmatpush.bf16.msra.mxu0 0
        %832 = vmatpush.bf16.msra.mxu0 0
        %833 = vmatpush.bf16.msra.mxu0 0
        %834 = vmatpush.bf16.msra.mxu0 0
        %835 = vmatpush.bf16.msra.mxu0 %v823
        %836 = vmatpush.bf16.msra.mxu0 %v822
        %837 = vmatmul.bf16.gmra.mxu0 %v827
        %v838 = vpop.f32.mrf.mxu0
        %v839 = vadd.f32 %v812, %v838
        %v840 = vpop.f32.mrf.mxu0
        %841 = vdwg.mxu0
        %v842 = vmax.f32 %v839, 0.0
        %v843 = vpack.c.bf16 %v842, %v842
        %v844 = vld [vmem:[%s10] sm:$0xf]
        %v845 = vld [vmem:[%s10 + $0x4] sm:$0xf]
        %v846 = vld [vmem:[%s10 + $0x8] sm:$0xf]
        %v847 = vld [vmem:[%s10 + $0xc] sm:$0xf]
        %v848 = vld [vmem:[%s10 + $0x10] sm:$0xf]
        %v849 = vld [vmem:[%s10 + $0x14] sm:$0xf]
        %v850 = vld [vmem:[%s10 + $0x18] sm:$0xf]
        %v851 = vld [vmem:[%s10 + $0x1c] sm:$0xf]
        %v852 = vld [vmem:[%s10 + $0x20] sm:$0xf]
        %v853 = vld [vmem:[%s10 + $0x24] sm:$0xf]
        %v854 = vld [vmem:[%s10 + $0x28] sm:$0xf]
        %v855 = vld [vmem:[%s10 + $0x2c] sm:$0xf]
        %v856 = vld [vmem:[%s10 + $0x30] sm:$0xf]
        %v857 = vld [vmem:[%s10 + $0x34] sm:$0xf]
        %v858 = vld [vmem:[%s10 + $0x38] sm:$0xf]
        %v859 = vld [vmem:[%s10 + $0x3c] sm:$0xf]
        %v860 = vld [vmem:[%s11] sm:$0x1]
        %v862 = vperm.slane %v860, 0
        %v880 = vunpack.c.l.b16 %v844
        %v881 = vunpack.c.l.b16 %v845
        %v882 = vunpack.c.l.b16 %v846
        %v883 = vunpack.c.l.b16 %v847
        %v884 = vunpack.c.l.b16 %v848
        %v885 = vunpack.c.l.b16 %v849
        %v886 = vunpack.c.l.b16 %v850
        %v887 = vunpack.c.l.b16 %v851
        %v888 = vunpack.c.l.b16 %v852
        %v889 = vunpack.c.l.b16 %v853
        %v890 = vunpack.c.l.b16 %v854
        %v891 = vunpack.c.l.b16 %v855
        %v892 = vunpack.c.l.b16 %v856
        %v893 = vunpack.c.l.b16 %v857
        %v894 = vunpack.c.l.b16 %v858
        %v895 = vunpack.c.l.b16 %v859
        %v896 = vpack.c.b16 %v881, %v880
        %v897 = vpack.c.b16 %v883, %v882
        %v898 = vpack.c.b16 %v885, %v884
        %v899 = vpack.c.b16 %v887, %v886
        %v900 = vpack.c.b16 %v889, %v888
        %v901 = vpack.c.b16 %v891, %v890
        %v902 = vpack.c.b16 %v893, %v892
        %v903 = vpack.c.b16 %v895, %v894
        %912 = vmatpush.bf16.msra.mxu0 %v903
        %913 = vmatpush.bf16.msra.mxu0 %v902
        %914 = vmatpush.bf16.msra.mxu0 %v901
        %915 = vmatpush.bf16.msra.mxu0 %v900
        %916 = vmatpush.bf16.msra.mxu0 %v899
        %917 = vmatpush.bf16.msra.mxu0 %v898
        %918 = vmatpush.bf16.msra.mxu0 %v897
        %919 = vmatpush.bf16.msra.mxu0 %v896
        %920 = vmatmul.bf16.gmra.mxu0 %v843
        %v921 = vpop.f32.mrf.mxu0
        %v922 = vadd.f32 %v862, %v921
        %v923 = vpop.f32.mrf.mxu0
        %924 = vdwg.mxu0
        %v925 = vadd.f32 %v772, %v922
        %926 = vst.msk [vmem:[%s404] sm:$0xff] %vm413, %v925
        %s927 = sand.u32 %s291, 1
        %s928 = scalar_lea.sflag [#allocation3], %s927
        %s929 = sand.u32 %s291, 1
        %s930 = smul.addr %s929, 8
        %s931 = scalar_lea.vmem [#allocation2], %s930
        // Predicated region
        $region69: #{tpu_custom_call.1} parent=67 // pred_check
          %p932 = pneg %p301
        $region70: #{tpu_custom_call.1} parent=67 // pred_check_branch
          %934 = sbr.rel (%p932) target = $region72
        $region71: #{tpu_custom_call.1} parent=67 // pred_region
          %936 = vsyncadd %s928, 0
          %s937 = smul.addr %s26, 8
          %s938 = scalar_lea.hbm %s12, %s937
          %s940 = sshll.u32 %s931, 4
          %s941 = int_to_ptr.vmem [resolvable:$true] %s940
          %s942 = sshll.u32 %s938, 4
          %s943 = int_to_ptr.hbm [resolvable:$true] %s942
          %945 = dma.vmem_to_hbm [thread:$0]  %s941, 128, %s943, %s928
        $region72: #{tpu_custom_call.1} parent=67 // pred_fallthru
          _
      $region68: #{tpu_custom_call.1} parent=5 // pred_fallthru
        _
      %p946 = scmp.le.s32.totalorder 2, %s21
      // Predicated region
      $region73: #{tpu_custom_call.1} parent=5 // pred_check
        %p947 = pneg %p946
      $region74: #{tpu_custom_call.1} parent=5 // pred_check_branch
        %949 = sbr.rel (%p947) target = $region76
      $region75: #{tpu_custom_call.1} parent=5 // pred_region
        %s950 = ssub.s32 %s21, 2
        // Predicated region
        $region77: #{tpu_custom_call.1} parent=75 // pred_check
          %p951 = pneg %p307
        $region78: #{tpu_custom_call.1} parent=75 // pred_check_branch
          %953 = sbr.rel (%p951) target = $region80
        $region79: #{tpu_custom_call.1} parent=75 // pred_region
          %s954 = sand.u32 %s292, 1
          %s955 = scalar_lea.sflag [#allocation3], %s954
          %s956 = sand.u32 %s292, 1
          %s957 = smul.addr %s956, 8
          %s958 = scalar_lea.vmem [#allocation2], %s957
          %960 = dma.done %s955, 128
        $region80: #{tpu_custom_call.1} parent=75 // pred_fallthru
          _
      $region76: #{tpu_custom_call.1} parent=5 // pred_fallthru
        _
    $region6: #{tpu_custom_call.1} parent=1 // loop_footer
      %s25 = sadd.s32 1, %s21
    $region7: #{tpu_custom_call.1} parent=1 // loop_footer_branch
      %20 = sbr.rel target = $region3
    $region8: #{tpu_custom_call.1} parent=1 // loop_exit
      _
    %961 = vsyncpa [#allocation3], 1
    %s962 = scalar_lea.sflag [#allocation3], 1
    %963 = vsyncpa %s962, 1

</llo_original>
